<compile_context>
chip_gen: v7x
topology: tpu7x:2x2x1
jax: 0.10.0
libtpu: 0.0.40
codegen_flags: <defaults>
</compile_context>

<pallas_src>
import functools

import jax
import jax.numpy as jnp
from jax.experimental import pallas as pl
from jax.experimental.pallas import tpu as pltpu


def _round_up(x, m):
    return ((x + m - 1) // m) * m


def _vmem_capacity_bytes():
    try:
        return int(pltpu.get_tpu_info().vmem_capacity_bytes)
    except Exception:
        return 64 * 1024 * 1024     # conservative fallback: v7x per-TC VMEM


def _tile_vmem_bytes(images_per_tile, n_pad, k, e_pad, out_itemsize):
    k_eff = _round_up(k, 128)       # bf16 tiles are lane-padded to 128 cols
    tm = images_per_tile * n_pad
    return (2 * tm * k_eff * 2          # double-buffered bf16 patch tile
            + 2 * k_eff * e_pad * 2     # bf16 weight (conservatively 2 buffers)
            + 2 * n_pad * e_pad * 4     # resident f32 pos+bias table
            + 2 * tm * e_pad * out_itemsize)   # double-buffered output tile


def _choose_images_per_tile(b, n_pad, k, e_pad, out_itemsize, budget):
    tm_cap = 2048                   # rows/step: amortizes ~0.35us step overhead
    t = max(1, min(b, tm_cap // n_pad))
    # Keep the grid at >= min(b, 4) steps so the pipeline has depth and a
    # dual-TensorCore part (v7x) can shard the "parallel" M axis.
    min_steps = min(b, 4)
    t = min(t, max(1, b // min_steps))
    while t > 1 and _tile_vmem_bytes(t, n_pad, k, e_pad, out_itemsize) > budget:
        t = max(1, t // 2)
    return t


def patch_embed_kernel(p_ref, w_ref, pos_ref, out_ref, *, images_per_tile, n_pad):
    # p_ref:   (TM, K)        bf16 flattened patches, TM = images_per_tile*N_pad
    # w_ref:   (K, E_pad)     bf16 flattened conv weight (constant block index)
    # pos_ref: (N_pad, E_pad) f32 per-patch-row (position + conv-bias) table
    # out_ref: (TM, E_pad)    patch embeddings
    acc = jnp.dot(p_ref[...], w_ref[...],
                  preferred_element_type=jnp.float32)        # MXU, f32 accumulate
    pos = pos_ref[...].astype(jnp.float32)
    if images_per_tile == 1:
        out = acc + pos
    else:
        e_pad = pos.shape[-1]
        out = (acc.reshape(images_per_tile, n_pad, e_pad) + pos[None, :, :]
               ).reshape(images_per_tile * n_pad, e_pad)
    out_ref[...] = out.astype(out_ref.dtype)                 # single aligned store


def patch_embedding_forward(x, conv_w, conv_b, cls_token, positions, patch_size,
                            out_dtype=jnp.float32):
    """x: (b, C, H, W) float32. Returns (b, N+1, E) in out_dtype."""
    b, C, H, W = x.shape
    E = conv_w.shape[0]
    p = patch_size
    hp, wp = H // p, W // p
    N = hp * wp
    K = C * p * p

    # --- tiling ---------------------------------------------------------------
    E_pad = _round_up(E, 128)                  # lane-dense output columns
    N_pad = _round_up(N, 16)                   # bf16 sublane-friendly rows/image
    out_itemsize = jnp.dtype(out_dtype).itemsize
    vmem_cap = _vmem_capacity_bytes()
    budget = int(0.6 * vmem_cap)
    TB = _choose_images_per_tile(b, N_pad, K, E_pad, out_itemsize, budget)
    B_pad = _round_up(b, TB)
    TM = TB * N_pad
    M_pad = B_pad * N_pad

    # --- JAX glue: patch extraction + bf16 cast (single fused XLA pass) --------
    # TODO(synk): fuse this layout op into the pallas_call (allow_input_fusion /
    # an NCHW BlockSpec) to drop the remaining extra HBM pass over activations.
    patches = (x.reshape(b, C, hp, p, wp, p)
                 .transpose(0, 2, 4, 1, 3, 5)
                 .reshape(b, N, K)
                 .astype(jnp.bfloat16))
    if (B_pad, N_pad) != (b, N):
        patches = jnp.pad(patches, ((0, B_pad - b), (0, N_pad - N), (0, 0)))
    patches_flat = patches.reshape(M_pad, K)

    w_p = jnp.pad(conv_w.reshape(E, K).T,
                  ((0, 0), (0, E_pad - E))).astype(jnp.bfloat16)   # (K, E_pad)

    # Small resident table: per-patch-row position + conv bias (stays f32).
    pos_tab = jnp.pad(positions[1:, :] + conv_b[None, :],
                      ((0, N_pad - N), (0, E_pad - E)))            # (N_pad, E_pad)

    est_vmem = _tile_vmem_bytes(TB, N_pad, K, E_pad, out_itemsize)
    vmem_limit = min(int(0.85 * vmem_cap),
                     max(32 * 1024 * 1024, est_vmem + 8 * 1024 * 1024))

    cost = pl.CostEstimate(
        flops=2 * M_pad * K * E_pad,
        transcendentals=0,
        bytes_accessed=(M_pad * K * 2 + K * E_pad * 2 + N_pad * E_pad * 4
                        + M_pad * E_pad * out_itemsize),
    )

    kernel = functools.partial(patch_embed_kernel,
                               images_per_tile=TB, n_pad=N_pad)

    out = pl.pallas_call(
        kernel,
        out_shape=jax.ShapeDtypeStruct((M_pad, E_pad), out_dtype),
        grid_spec=pltpu.PrefetchScalarGridSpec(
            num_scalar_prefetch=0,
            grid=(M_pad // TM,),
            in_specs=[
                pl.BlockSpec((TM, K), lambda i: (i, 0)),
                pl.BlockSpec((K, E_pad), lambda i: (0, 0)),      # constant block
                pl.BlockSpec((N_pad, E_pad), lambda i: (0, 0)),  # resident table
            ],
            out_specs=pl.BlockSpec((TM, E_pad), lambda i: (i, 0)),
        ),
        compiler_params=pltpu.CompilerParams(
            # TODO(synk): on v7x try pltpu.CORE_PARALLEL for explicit dual-TC
            # sharding of the M axis.
            dimension_semantics=("parallel",),
            vmem_limit_bytes=vmem_limit,
        ),
        cost_estimate=cost,
    )(patches_flat, w_p, pos_tab)

    emb = out.reshape(B_pad, N_pad, E_pad)[:b, :N, :E]            # strip padding
    cls_row = (cls_token.reshape(E) + positions[0, :]).reshape(1, 1, E)
    cls_rows = jnp.broadcast_to(cls_row, (b, 1, E)).astype(out_dtype)
    return jnp.concatenate([cls_rows, emb.astype(out_dtype)], axis=1)


if __name__ == "__main__":
    # Small shapes consistent with the module: in_channels=4, patch_size=4,
    # emb_size=32, img_size=16 -> N = (16/4)^2 = 16 patches, seq = 17.
    B, C, IMG, P, E = 2, 4, 16, 4, 32
    N = (IMG // P) ** 2
    K = C * P * P

    key = jax.random.PRNGKey(0)
    kx, kw, kb, kc, kp = jax.random.split(key, 5)
    x = jax.random.normal(kx, (B, C, IMG, IMG), dtype=jnp.float32)
    conv_w = jax.random.normal(kw, (E, C, P, P), dtype=jnp.float32) * 0.02
    conv_b = jax.random.normal(kb, (E,), dtype=jnp.float32) * 0.02
    cls_token = jax.random.normal(kc, (1, 1, E), dtype=jnp.float32)
    positions = jax.random.normal(kp, (N + 1, E), dtype=jnp.float32)

    out = patch_embedding_forward(x, conv_w, conv_b, cls_token, positions, P)
    out = jax.block_until_ready(out)

    # Pure-JAX f32 reference (same math as the PyTorch module).
    patches_ref = x.reshape(B, C, IMG // P, P, IMG // P, P)
    patches_ref = patches_ref.transpose(0, 2, 4, 1, 3, 5).reshape(B, N, K)
    emb_ref = patches_ref @ conv_w.reshape(E, K).T + conv_b
    cls_ref = jnp.broadcast_to(cls_token, (B, 1, E))
    ref = jnp.concatenate([cls_ref, emb_ref], axis=1) + positions

    assert out.shape == (B, N + 1, E)
    # bf16 kernel inputs (intentional precision choice; f32 accumulation) ->
    # loosened tolerance vs the pure-f32 reference.
    assert jnp.allclose(out, ref, atol=2e-2, rtol=2e-2), (
        float(jnp.max(jnp.abs(out - ref))))
    print("KERNEL_OK")
</pallas_src>

<mosaic_0001>
module attributes {stable_mosaic.version = 11 : i64} {
  func.func @patch_embed_kernel(%arg0: i32, %arg1: memref<16x64xbf16, #tpu.memory_space<vmem>>, %arg2: memref<64x128xbf16, #tpu.memory_space<vmem>>, %arg3: memref<16x128xf32, #tpu.memory_space<vmem>>, %arg4: memref<16x128xf32, #tpu.memory_space<vmem>>) attributes {dimension_semantics = [#tpu.dimension_semantics<parallel>], iteration_bounds = array<i64: 2>, scalar_prefetch = 0 : i64, scratch_operands = 0 : i64, tpu.core_type = #tpu.core_type<tc>, window_params = [{transform_indices = @transform_0, window_bounds = array<i64: 16, 64>}, {pipeline_mode = #tpu.pipeline_mode<synchronous>, transform_indices = @transform_1, window_bounds = array<i64: 64, 128>}, {pipeline_mode = #tpu.pipeline_mode<synchronous>, transform_indices = @transform_2, window_bounds = array<i64: 16, 128>}, {transform_indices = @transform_3, window_bounds = array<i64: 16, 128>}]} {
    %c0 = arith.constant 0 : index
    %c0_0 = arith.constant 0 : index
    %0 = vector.load %arg1[%c0, %c0_0] : memref<16x64xbf16, #tpu.memory_space<vmem>>, vector<16x64xbf16>
    %c0_1 = arith.constant 0 : index
    %c0_2 = arith.constant 0 : index
    %1 = vector.load %arg2[%c0_1, %c0_2] : memref<64x128xbf16, #tpu.memory_space<vmem>>, vector<64x128xbf16>
    %cst = arith.constant dense<0.000000e+00> : vector<16x128xf32>
    %2 = tpu.matmul %0, %1, %cst {dimension_numbers = #tpu.dot_dimension_numbers<[1], [0], [0], [1], [0, 0, 1, 1], [], []>} : vector<16x64xbf16>, vector<64x128xbf16>, vector<16x128xf32> -> vector<16x128xf32>
    %c0_3 = arith.constant 0 : index
    %c0_4 = arith.constant 0 : index
    %3 = vector.load %arg3[%c0_3, %c0_4] : memref<16x128xf32, #tpu.memory_space<vmem>>, vector<16x128xf32>
    %4 = arith.addf %2, %3 : vector<16x128xf32>
    %c0_5 = arith.constant 0 : index
    %c0_6 = arith.constant 0 : index
    %5 = vector.load %arg4[%c0_5, %c0_6] : memref<16x128xf32, #tpu.memory_space<vmem>>, vector<16x128xf32>
    tpu.vector_store %arg4[%c0_5, %c0_6], %4 {strides = array<i32>} : memref<16x128xf32, #tpu.memory_space<vmem>>, vector<16x128xf32>,
    return
  }
  func.func @transform_0(%arg0: i32) -> (i32, i32) {
    %c0_i32 = arith.constant 0 : i32
    %c0_i32_0 = arith.constant 0 : i32
    return %arg0, %c0_i32 : i32, i32
  }
  func.func @transform_1(%arg0: i32) -> (i32, i32) {
    %c0_i32 = arith.constant 0 : i32
    %c0_i32_0 = arith.constant 0 : i32
    %c0_i32_1 = arith.constant 0 : i32
    return %c0_i32, %c0_i32_0 : i32, i32
  }
  func.func @transform_2(%arg0: i32) -> (i32, i32) {
    %c0_i32 = arith.constant 0 : i32
    %c0_i32_0 = arith.constant 0 : i32
    %c0_i32_1 = arith.constant 0 : i32
    return %c0_i32, %c0_i32_0 : i32, i32
  }
  func.func @transform_3(%arg0: i32) -> (i32, i32) {
    %c0_i32 = arith.constant 0 : i32
    %c0_i32_0 = arith.constant 0 : i32
    return %arg0, %c0_i32 : i32, i32
  }
}

</mosaic_0001>

<llo_original>
// kernel: tpu_custom_call.1
$region0: #{tpu_custom_call.1}
  #allocation0 [shape = 'u32[]', space=smem, size = 0x4, offset = 0x4, fixed_abs, tag = 'smem constant byte address 0x4 - core index']
  #allocation1 [shape = 'u32[144,128]{1,0:T(1,128)}', space=vmem, size = 0x12000, scoped, tag = 'internal scratch']
  %s0 = inlined_call_operand.hbm [shape: bf16[32,64], index: 0, kind: input, shape index: {}]
  %s1 = inlined_call_operand.hbm [shape: bf16[64,128], index: 1, kind: input, shape index: {}]
  %s2 = inlined_call_operand.hbm [shape: f32[16,128], index: 2, kind: input, shape index: {}]
  %s3 = inlined_call_operand.hbm [shape: f32[32,128], index: 3, kind: output, shape index: {}]
  %s4 = sld [smem:[#allocation0]]
  $region57: #{tpu_custom_call.1} parent=0
    _
  %s6 = ssub.s32 1, %s4
  %s7 = scalar_select 0, %s6, %s4
  $region1: #{tpu_custom_call.1} parent=0
    #allocation2 [shape = 'u8[8192]{0}', space=vmem, size = 0x2000, scoped, tag = 'input window, operand 0']
    #allocation3 [shape = 's32[2]{0}', space=sflag, size = 0x8, scoped, tag = 'scoped memory for tpu_custom_call.1']
    #allocation4 [shape = 's32[2]{0}', space=sflag, size = 0x8, scoped, tag = 'scoped memory for tpu_custom_call.1']
    #allocation5 [shape = 'u8[16384]{0}', space=vmem, size = 0x4000, scoped, tag = 'input window, operand 1, single buffered']
    #allocation6 [shape = 's32[1]{0}', space=sflag, size = 0x4, scoped, tag = 'scoped memory for tpu_custom_call.1']
    #allocation7 [shape = 'u8[8192]{0}', space=vmem, size = 0x2000, scoped, tag = 'input window, operand 2, single buffered']
    #allocation8 [shape = 'u8[16384]{0}', space=vmem, size = 0x4000, scoped, tag = 'output window, operand 0']
    %8 = vsyncpa [#allocation3], 0
    %s9 = scalar_lea.sflag [#allocation3], 1
    %10 = vsyncpa %s9, 0
    %11 = vsyncpa [#allocation6], 0
    %12 = vsyncpa [#allocation4], 0
    %s13 = scalar_lea.sflag [#allocation4], 1
    %14 = vsyncpa %s13, 0
    loop: start=0, step=1, limit=4
    $region2: #{tpu_custom_call.1} parent=1 // loop_pre_header
      _
    $region3: #{tpu_custom_call.1} parent=1 // loop_header
      %s16 = sphi 0, %s20
      %p17 = scmp.ge.s32.totalorder %s16, 4
      %s26 = sphi 0, %s28
      %s29 = sphi 0, %s26
      %s30 = sphi 0, %s29
      %s46 = sphi 0, %s30
      %s50 = sphi 0, %s50
      %s52 = sphi 0, %s50
      %s53 = sphi 0, %s52
      %s67 = sphi 0, %s53
      %s71 = sphi 0, %s71
      %s73 = sphi 0, %s71
      %s74 = sphi 0, %s73
      %s88 = sphi 0, %s74
      %s94 = sphi 0, %s96
      %s97 = sphi 0, %s94
      %s98 = sphi 0, %s97
      %s114 = sphi 0, %s98
    $region4: #{tpu_custom_call.1} parent=1 // loop_header_branch
      %19 = sbr.rel (%p17) target = $region8
    $region5: #{tpu_custom_call.1} parent=1 // loop_body
      %s21 = ssub.s32 %s16, 1
      %s22 = ssub.s32 %s16, 2
      %s23 = sadd.s32 %s16, 1
      %s24 = ssub.s32 %s16, %s23
      %p25 = scmp.eq.s32.totalorder %s24, 0
      %s27 = sadd.s32 %s26, 1
      %s28 = scalar_select %p25, %s26, %s27
      %p31 = pneg %p25
      %p32 = scmp.eq.s32.totalorder %s16, 1
      %p33 = por %p31, %p32
      %p34 = scmp.ne.s32.totalorder %s26, %s29
      %p35 = scmp.eq.s32.totalorder %s16, 0
      %p36 = por %p34, %p35
      %p37 = scmp.ne.s32.totalorder %s26, %s29
      %p38 = scmp.eq.s32.totalorder %s21, 1
      %p39 = por %p37, %p38
      %p40 = scmp.ne.s32.totalorder %s29, %s30
      %p41 = scmp.eq.s32.totalorder %s21, 0
      %p42 = por %p40, %p41
      %p43 = scmp.ne.s32.totalorder %s29, %s30
      %p44 = scmp.eq.s32.totalorder %s22, 1
      %p45 = por %p43, %p44
      %p47 = scmp.ne.s32.totalorder %s30, %s46
      %p48 = scmp.eq.s32.totalorder %s22, 0
      %p49 = por %p47, %p48
      %s51 = sadd.s32 %s50, 1
      %p54 = scmp.eq.s32.totalorder %s16, 1
      %p55 = scmp.ne.s32.totalorder %s50, %s52
      %p56 = scmp.eq.s32.totalorder %s16, 0
      %p57 = por %p55, %p56
      %p58 = scmp.ne.s32.totalorder %s50, %s52
      %p59 = scmp.eq.s32.totalorder %s21, 1
      %p60 = por %p58, %p59
      %p61 = scmp.ne.s32.totalorder %s52, %s53
      %p62 = scmp.eq.s32.totalorder %s21, 0
      %p63 = por %p61, %p62
      %p64 = scmp.ne.s32.totalorder %s52, %s53
      %p65 = scmp.eq.s32.totalorder %s22, 1
      %p66 = por %p64, %p65
      %p68 = scmp.ne.s32.totalorder %s53, %s67
      %p69 = scmp.eq.s32.totalorder %s22, 0
      %p70 = por %p68, %p69
      %s72 = sadd.s32 %s71, 1
      %p75 = scmp.eq.s32.totalorder %s16, 1
      %p76 = scmp.ne.s32.totalorder %s71, %s73
      %p77 = scmp.eq.s32.totalorder %s16, 0
      %p78 = por %p76, %p77
      %p79 = scmp.ne.s32.totalorder %s71, %s73
      %p80 = scmp.eq.s32.totalorder %s21, 1
      %p81 = por %p79, %p80
      %p82 = scmp.ne.s32.totalorder %s73, %s74
      %p83 = scmp.eq.s32.totalorder %s21, 0
      %p84 = por %p82, %p83
      %p85 = scmp.ne.s32.totalorder %s73, %s74
      %p86 = scmp.eq.s32.totalorder %s22, 1
      %p87 = por %p85, %p86
      %p89 = scmp.ne.s32.totalorder %s74, %s88
      %p90 = scmp.eq.s32.totalorder %s22, 0
      %p91 = por %p89, %p90
      %s92 = ssub.s32 %s16, %s23
      %p93 = scmp.eq.s32.totalorder %s92, 0
      %s95 = sadd.s32 %s94, 1
      %s96 = scalar_select %p93, %s94, %s95
      %p99 = pneg %p93
      %p100 = scmp.eq.s32.totalorder %s16, 1
      %p101 = por %p99, %p100
      %p102 = scmp.ne.s32.totalorder %s94, %s97
      %p103 = scmp.eq.s32.totalorder %s16, 0
      %p104 = por %p102, %p103
      %p105 = scmp.ne.s32.totalorder %s94, %s97
      %p106 = scmp.eq.s32.totalorder %s21, 1
      %p107 = por %p105, %p106
      %p108 = scmp.ne.s32.totalorder %s97, %s98
      %p109 = scmp.eq.s32.totalorder %s21, 0
      %p110 = por %p108, %p109
      %p111 = scmp.ne.s32.totalorder %s97, %s98
      %p112 = scmp.eq.s32.totalorder %s22, 1
      %p113 = por %p111, %p112
      %p115 = scmp.ne.s32.totalorder %s98, %s114
      %p116 = scmp.eq.s32.totalorder %s22, 0
      %p117 = por %p115, %p116
      %p118 = scmp.le.s32.totalorder 1, %s16
      %p119 = scmp.lt.s32.totalorder %s16, 3
      %p120 = pnand %p118, %p119
      %p121 = pneg %p120
      // Predicated region
      $region9: #{tpu_custom_call.1} parent=5 // pred_check
        _
      $region10: #{tpu_custom_call.1} parent=5 // pred_check_branch
        %123 = sbr.rel (%p120) target = $region12
      $region11: #{tpu_custom_call.1} parent=5 // pred_region
        %s124 = ssub.s32 %s16, 1
        // Predicated region
        $region13: #{tpu_custom_call.1} parent=11 // pred_check
          %p125 = pneg %p63
        $region14: #{tpu_custom_call.1} parent=11 // pred_check_branch
          %127 = sbr.rel (%p125) target = $region16
        $region15: #{tpu_custom_call.1} parent=11 // pred_region
          %s129 = ssub.s32 512, 512
          %130 = vsyncadd [#allocation6], %s129
          %s131 = sshll.u32 [#allocation5], 4
          %s132 = int_to_ptr.vmem [resolvable:$true] %s131
          %137 = dma.hbm_to_vmem [thread:$0]  %s1, 512, %s132, [#allocation6], 64, 64, 4
        $region16: #{tpu_custom_call.1} parent=11 // pred_fallthru
          _
        // Predicated region
        $region17: #{tpu_custom_call.1} parent=11 // pred_check
          %p138 = pneg %p84
        $region18: #{tpu_custom_call.1} parent=11 // pred_check_branch
          %140 = sbr.rel (%p138) target = $region20
        $region19: #{tpu_custom_call.1} parent=11 // pred_region
          %s142 = ssub.s32 256, 256
          %143 = vsyncadd [#allocation6], %s142
          %s144 = sshll.u32 [#allocation7], 4
          %s145 = int_to_ptr.vmem [resolvable:$true] %s144
          %150 = dma.hbm_to_vmem [thread:$0]  %s2, 256, %s145, [#allocation6], 128, 128, 8
        $region20: #{tpu_custom_call.1} parent=11 // pred_fallthru
          _
      $region12: #{tpu_custom_call.1} parent=5 // pred_fallthru
        _
      %p151 = scmp.lt.s32.totalorder %s16, 2
      // Predicated region
      $region21: #{tpu_custom_call.1} parent=5 // pred_check
        %p152 = pneg %p151
      $region22: #{tpu_custom_call.1} parent=5 // pred_check_branch
        %154 = sbr.rel (%p152) target = $region24
      $region23: #{tpu_custom_call.1} parent=5 // pred_region
        // Predicated region
        $region25: #{tpu_custom_call.1} parent=23 // pred_check
          %p155 = pneg %p36
        $region26: #{tpu_custom_call.1} parent=23 // pred_check_branch
          %157 = sbr.rel (%p155) target = $region28
        $region27: #{tpu_custom_call.1} parent=23 // pred_region
          %s158 = sand.u32 %s26, 1
          %s159 = scalar_lea.sflag [#allocation3], %s158
          %s160 = sand.u32 %s26, 1
          %s161 = smul.addr %s160, 8
          %s162 = scalar_lea.vmem [#allocation2], %s161
          %s163 = smul.u32 2, %s16
          %s165 = ssub.s32 128, 128
          %166 = vsyncadd %s159, %s165
          %s167 = smul.addr %s163, 64
          %s168 = scalar_lea.hbm %s0, %s167
          %s169 = sshll.u32 %s162, 4
          %s170 = int_to_ptr.vmem [resolvable:$true] %s169
          %175 = dma.hbm_to_vmem [thread:$0]  %s168, 128, %s170, %s159, 64, 64, 4
        $region28: #{tpu_custom_call.1} parent=23 // pred_fallthru
          _
      $region24: #{tpu_custom_call.1} parent=5 // pred_fallthru
        _
      %p176 = scmp.le.s32.totalorder 1, %s16
      %p177 = scmp.lt.s32.totalorder %s16, 3
      %p178 = pnand %p176, %p177
      %p179 = pneg %p178
      // Predicated region
      $region29: #{tpu_custom_call.1} parent=5 // pred_check
        _
      $region30: #{tpu_custom_call.1} parent=5 // pred_check_branch
        %181 = sbr.rel (%p178) target = $region32
      $region31: #{tpu_custom_call.1} parent=5 // pred_region
        %s182 = ssub.s32 %s16, 1
        %s183 = sand.u32 %s29, 1
        %s184 = scalar_lea.sflag [#allocation3], %s183
        %s185 = sand.u32 %s29, 1
        %s186 = smul.addr %s185, 8
        %s187 = scalar_lea.vmem [#allocation2], %s186
        // Predicated region
        $region33: #{tpu_custom_call.1} parent=31 // pred_check
          %p188 = pneg %p42
        $region34: #{tpu_custom_call.1} parent=31 // pred_check_branch
          %190 = sbr.rel (%p188) target = $region36
        $region35: #{tpu_custom_call.1} parent=31 // pred_region
          %191 = dma.done %s184, 128
        $region36: #{tpu_custom_call.1} parent=31 // pred_fallthru
          _
        // Predicated region
        $region37: #{tpu_custom_call.1} parent=31 // pred_check
          %p192 = pneg %p63
        $region38: #{tpu_custom_call.1} parent=31 // pred_check_branch
          %194 = sbr.rel (%p192) target = $region40
        $region39: #{tpu_custom_call.1} parent=31 // pred_region
          %195 = dma.done [#allocation6], 512
        $region40: #{tpu_custom_call.1} parent=31 // pred_fallthru
          _
        // Predicated region
        $region41: #{tpu_custom_call.1} parent=31 // pred_check
          %p196 = pneg %p84
        $region42: #{tpu_custom_call.1} parent=31 // pred_check_branch
          %198 = sbr.rel (%p196) target = $region44
        $region43: #{tpu_custom_call.1} parent=31 // pred_region
          %199 = dma.done [#allocation6], 256
        $region44: #{tpu_custom_call.1} parent=31 // pred_fallthru
          _
        %s200 = sand.u32 %s29, 1
        %s201 = scalar_lea.sflag [#allocation3], %s200
        %s202 = sand.u32 %s29, 1
        %s203 = smul.addr %s202, 8
        %s204 = scalar_lea.vmem [#allocation2], %s203
        %p205 = pneg %p42
        %p206 = pneg %p39
        %p207 = pneg %p63
        %p208 = pneg %p60
        %p209 = pneg %p84
        %p210 = pneg %p81
        %p211 = pneg %p110
        %p212 = pneg %p107
        %s213 = sand.u32 %s97, 1
        %s214 = scalar_lea.sflag [#allocation4], %s213
        %s215 = sand.u32 %s97, 1
        %s216 = smul.addr %s215, 16
        %s217 = scalar_lea.vmem [#allocation8], %s216
        %s218 = smul.u32 2, %s21
        %s219 = smul.u32 2, %s21
        %v221 = vld [vmem:[%s187] sm:$0xf]
        %v222 = vld [vmem:[%s187 + $0x4] sm:$0xf]
        %v223 = vld [vmem:[#allocation5] sm:$0xf]
        %v224 = vld [vmem:[#allocation5 + $0x4] sm:$0xf]
        %v225 = vld [vmem:[#allocation5 + $0x8] sm:$0xf]
        %v226 = vld [vmem:[#allocation5 + $0xc] sm:$0xf]
        %v227 = vld [vmem:[#allocation5 + $0x10] sm:$0xf]
        %v228 = vld [vmem:[#allocation5 + $0x14] sm:$0xf]
        %v229 = vld [vmem:[#allocation5 + $0x18] sm:$0xf]
        %v230 = vld [vmem:[#allocation5 + $0x1c] sm:$0xf]
        %v231 = vld [vmem:[#allocation7] sm:$0xff]
        %v232 = vld [vmem:[#allocation7 + $0x8] sm:$0xff]
        %v235 = vunpack.c.l.b16 %v221
        %v236 = vunpack.c.l.b16 %v222
        %v237 = vpack.c.b16 %v236, %v235
        %v246 = vunpack.c.l.b16 %v223
        %v247 = vunpack.c.l.b16 %v224
        %v248 = vunpack.c.l.b16 %v225
        %v249 = vunpack.c.l.b16 %v226
        %v250 = vunpack.c.l.b16 %v227
        %v251 = vunpack.c.l.b16 %v228
        %v252 = vunpack.c.l.b16 %v229
        %v253 = vunpack.c.l.b16 %v230
        %v254 = vpack.c.b16 %v247, %v246
        %v255 = vpack.c.b16 %v249, %v248
        %v256 = vpack.c.b16 %v251, %v250
        %v257 = vpack.c.b16 %v253, %v252
        %vm262 = vcmask 523264
        %v264 = vsel %vm262, %v237, 0
        %266 = vmatprep.subr.bf16.mxu0 0
        %267 = vmatpush1.bf16.msra.mxu0 %v254
        %268 = vmatprep.subr.bf16.mxu0 0
        %269 = vmatpush1.bf16.msra.mxu0 %v255
        %270 = vmatprep.subr.bf16.mxu0 0
        %271 = vmatpush1.bf16.msra.mxu0 %v256
        %272 = vmatprep.subr.bf16.mxu0 0
        %273 = vmatpush1.bf16.msra.mxu0 %v257
        %274 = vmatprep.subr.bf16.mxu0 0
        %275 = vmatpush1.bf16.msra.mxu0 0
        %276 = vmatprep.subr.bf16.mxu0 0
        %277 = vmatpush1.bf16.msra.mxu0 0
        %278 = vmatprep.subr.bf16.mxu0 0
        %279 = vmatpush1.bf16.msra.mxu0 0
        %280 = vmatprep.subr.bf16.mxu0 0
        %281 = vmatpush1.bf16.msra.mxu0 0
        %282 = vmatprep.subr.bf16.mxu0 0
        %283 = vmatpush1.bf16.msra.mxu0 0
        %284 = vmatprep.subr.bf16.mxu0 0
        %285 = vmatpush1.bf16.msra.mxu0 0
        %286 = vmatprep.subr.bf16.mxu0 0
        %287 = vmatpush1.bf16.msra.mxu0 0
        %288 = vmatprep.subr.bf16.mxu0 0
        %289 = vmatpush1.bf16.msra.mxu0 0
        %290 = vmatprep.subr.bf16.mxu0 0
        %291 = vmatpush1.bf16.msra.mxu0 0
        %292 = vmatprep.subr.bf16.mxu0 0
        %293 = vmatpush1.bf16.msra.mxu0 0
        %294 = vmatprep.subr.bf16.mxu0 0
        %295 = vmatpush1.bf16.msra.mxu0 0
        %296 = vmatprep.subr.bf16.mxu0 0
        %297 = vmatpush1.bf16.msra.mxu0 0
        %298 = vmatprep.mubr.bf16.mxu0 0
        %299 = vmatmul.mubr.bf16.gmra.mrb[0].mxu0 %v264
        %v300 = vpop.f32.mrb[0].mxu0
        %v301 = vadd.f32 %v231, %v300
        %v302 = vpop.f32.mrb[0].mxu0
        %v303 = vpop.f32.mrb[0].mxu0
        %v304 = vadd.f32 %v232, %v303
        %v305 = vpop.f32.mrb[0].mxu0
        %306 = vdwg.mxu0
        %307 = vst [vmem:[%s217] sm:$0xff] %v301
        %308 = vst [vmem:[%s217 + $0x8] sm:$0xff] %v304
        %s309 = sand.u32 %s97, 1
        %s310 = scalar_lea.sflag [#allocation4], %s309
        %s311 = sand.u32 %s97, 1
        %s312 = smul.addr %s311, 16
        %s313 = scalar_lea.vmem [#allocation8], %s312
        // Predicated region
        $region45: #{tpu_custom_call.1} parent=31 // pred_check
          %p314 = pneg %p107
        $region46: #{tpu_custom_call.1} parent=31 // pred_check_branch
          %316 = sbr.rel (%p314) target = $region48
        $region47: #{tpu_custom_call.1} parent=31 // pred_region
          %s317 = smul.u32 2, %s21
          %s319 = ssub.s32 256, 256
          %320 = vsyncadd %s310, %s319
          %s321 = smul.addr %s317, 128
          %s322 = scalar_lea.hbm %s3, %s321
          %s323 = sshll.u32 %s313, 4
          %s324 = int_to_ptr.vmem [resolvable:$true] %s323
          %329 = dma.vmem_to_hbm [thread:$0]  %s324, 256, %s322, %s310, 128, 128, 8
        $region48: #{tpu_custom_call.1} parent=31 // pred_fallthru
          _
      $region32: #{tpu_custom_call.1} parent=5 // pred_fallthru
        _
      %p330 = scmp.le.s32.totalorder 2, %s16
      // Predicated region
      $region49: #{tpu_custom_call.1} parent=5 // pred_check
        %p331 = pneg %p330
      $region50: #{tpu_custom_call.1} parent=5 // pred_check_branch
        %333 = sbr.rel (%p331) target = $region52
      $region51: #{tpu_custom_call.1} parent=5 // pred_region
        %s334 = ssub.s32 %s16, 2
        // Predicated region
        $region53: #{tpu_custom_call.1} parent=51 // pred_check
          %p335 = pneg %p113
        $region54: #{tpu_custom_call.1} parent=51 // pred_check_branch
          %337 = sbr.rel (%p335) target = $region56
        $region55: #{tpu_custom_call.1} parent=51 // pred_region
          %s338 = sand.u32 %s98, 1
          %s339 = scalar_lea.sflag [#allocation4], %s338
          %s340 = sand.u32 %s98, 1
          %s341 = smul.addr %s340, 16
          %s342 = scalar_lea.vmem [#allocation8], %s341
          %343 = dma.done %s339, 256
        $region56: #{tpu_custom_call.1} parent=51 // pred_fallthru
          _
      $region52: #{tpu_custom_call.1} parent=5 // pred_fallthru
        _
    $region6: #{tpu_custom_call.1} parent=1 // loop_footer
      %s20 = sadd.s32 1, %s16
    $region7: #{tpu_custom_call.1} parent=1 // loop_footer_branch
      %15 = sbr.rel target = $region3
    $region8: #{tpu_custom_call.1} parent=1 // loop_exit
      _
    %344 = vsyncpa [#allocation3], 1
    %s345 = scalar_lea.sflag [#allocation3], 1
    %346 = vsyncpa %s345, 1
    %347 = vsyncpa [#allocation6], 1
    %348 = vsyncpa [#allocation4], 1
    %s349 = scalar_lea.sflag [#allocation4], 1
    %350 = vsyncpa %s349, 1

</llo_original>
